<compile_context>
chip_gen: v7x
topology: tpu7x:2x2x1
jax: 0.10.0
libtpu: 0.0.40
codegen_flags: <defaults>
</compile_context>

<pallas_src>
import functools

import jax
import jax.numpy as jnp
from jax.experimental import pallas as pl
from jax.experimental.pallas import tpu as pltpu


LANES = 128


def _mbstd_fused_kernel(x_ref, o_ref, stage_ref, acc_ref, ybuf_ref, sem,
                        *, G, M, HW, CHW, T, NT, chw_f, hint_x, hint_y):
    """One grid step = one (N, T) column tile of feature f.

    x_ref    : (N, T) VMEM tile of x viewed as (N, C*H*W)    (auto-pipelined)
    o_ref    : (N, (C+F)*H*W) raw HBM ref of the fused output (manual DMA)
    stage_ref: (2, N, T) staging slots for the fused x -> out copy
    acc_ref  : (M, 128) f32 lane-wise running sum of per-element group-std
    ybuf_ref : (N, HW) staging buffer for the broadcast stats channel
    sem      : (3,) DMA semaphores (0/1: x-copy slots, 2: stats-channel write)
    """
    f = pl.program_id(0)
    t = pl.program_id(1)
    slot = t % 2
    N = G * M

    # --- deferred write-back: the copy issued two steps ago used this slot --
    # (the src/dst refs of a .wait() are only used for sizing)
    if NT >= 3:
        @pl.when(t >= 2)
        def _():
            pltpu.make_async_copy(stage_ref.at[slot],
                                  o_ref.at[:, pl.ds(0, T)],
                                  sem.at[slot]).wait()

    # --- stage the tile & start the fused x -> out[:, :C*H*W] copy ----------
    xv = x_ref[...]                                   # native dtype

    @pl.when(slot == 0)
    def _():
        stage_ref[0] = xv

    @pl.when(slot == 1)
    def _():
        stage_ref[1] = xv

    col = f * chw_f + t * T
    if hint_x:
        col = pl.multiple_of(col, LANES)
    xcopy = pltpu.make_async_copy(stage_ref.at[slot],
                                  o_ref.at[:, pl.ds(col, T)],
                                  sem.at[slot])
    xcopy.start()

    # --- group-std reduction for this tile (fp32 upcast in VMEM) ------------
    @pl.when(t == 0)
    def _():
        acc_ref[...] = jnp.zeros_like(acc_ref)

    x = xv.astype(jnp.float32)                        # (N, T)
    # Mean over the group axis (batch index n = g*M + m) without forming any
    # (G, M, T) temporaries: short unrolled loop over G row-blocks of M rows.
    s = x[0:M, :]
    for g in range(1, G):
        s = s + x[g * M:(g + 1) * M, :]
    mu = s * (1.0 / G)                                # (M, T)
    var = None
    for g in range(G):
        d = x[g * M:(g + 1) * M, :] - mu
        var = d * d if var is None else var + d * d
    var = var * (1.0 / G)                             # (M, T) biased variance
    std = jnp.sqrt(var + 1e-8)

    # Lane-wise partial accumulation (VALU only, lane-aligned static slices);
    # the single cross-lane (XLU) reduction happens once per feature below.
    nfull = T // LANES
    if nfull > 0:
        part = std[:, 0:LANES]
        for j in range(1, nfull):
            part = part + std[:, j * LANES:(j + 1) * LANES]
    else:
        part = jnp.zeros((M, LANES), jnp.float32)
    rem = T - nfull * LANES
    if rem:  # only reachable on the rare non-128-divisible single-tile path
        tail = jnp.sum(std[:, nfull * LANES:], axis=-1, keepdims=True)   # (M,1)
        lane0 = jax.lax.broadcasted_iota(jnp.int32, (M, LANES), 1) == 0
        part = part + jnp.where(lane0, tail, jnp.zeros_like(part))
    acc_ref[...] += part

    # --- last tile of this feature: stats channel + drain in-flight copies --
    @pl.when(t == NT - 1)
    def _():
        stats = jnp.sum(acc_ref[...], axis=-1, keepdims=True) * (1.0 / chw_f)
        yb = jnp.broadcast_to(jnp.tile(stats, (G, 1)), (N, HW))
        ybuf_ref[...] = yb.astype(ybuf_ref.dtype)
        ycol = CHW + f * HW
        if hint_y:
            ycol = pl.multiple_of(ycol, LANES)
        ycopy = pltpu.make_async_copy(ybuf_ref,
                                      o_ref.at[:, pl.ds(ycol, HW)],
                                      sem.at[2])
        ycopy.start()
        # Drain this feature's in-flight x copies (overlaps with ycopy).
        xcopy.wait()
        if NT >= 2:
            pltpu.make_async_copy(stage_ref.at[1 - slot],
                                  o_ref.at[:, pl.ds(0, T)],
                                  sem.at[1 - slot]).wait()
        ycopy.wait()


def _pick_tile(chw_f, N, M, itemsize):
    """Largest 128-multiple divisor of chw_f whose working set fits VMEM."""
    TILE_VMEM_BUDGET = 16 * 1024 * 1024   # tile-dependent bytes (v7x 64 MiB safe)
    T_MAX = 16384                         # keep unrolled lane loops bounded

    def tile_bytes(t):
        # 2x double-buffered input + 2x out-staging (native dtype) + fp32 temps.
        return 4 * N * t * itemsize + (N + 3 * M) * t * 4

    best_multi = None
    best_any = None
    if chw_f % LANES == 0:
        k = 1
        while LANES * k <= min(chw_f, T_MAX):
            t = LANES * k
            if chw_f % t == 0 and tile_bytes(t) <= TILE_VMEM_BUDGET:
                best_any = t
                if chw_f // t >= 2:       # prefer >=2 tiles for DMA/compute overlap
                    best_multi = t
            k += 1
    return best_multi if best_multi is not None else best_any


def minibatch_std_layer(x, group_size, num_channels=1):
    """JAX/Pallas equivalent of MinibatchStdLayer.forward.

    x: (N, C, H, W); returns (N, C + num_channels, H, W) in x.dtype.
    """
    N, C, H, W = x.shape
    G = int(min(group_size, N)) if group_size is not None else N
    F = int(num_channels)
    if N % G != 0:
        raise ValueError(f"batch size {N} must be divisible by group size {G}")
    if C % F != 0:
        raise ValueError(f"channels {C} must be divisible by num_channels {F}")
    M = N // G
    c = C // F
    HW = H * W
    chw_f = c * HW                 # per-feature reduction width
    CHW = C * HW
    OUT_W = (C + F) * HW
    itemsize = jnp.dtype(x.dtype).itemsize

    T = _pick_tile(chw_f, N, M, itemsize)
    if T is None:
        fallback_bytes = 4 * N * chw_f * itemsize + (N + 3 * M) * chw_f * 4
        if F == 1 and fallback_bytes <= 40 * 1024 * 1024:
            T = chw_f              # single full-width tile (always a legal block)
        else:
            # TODO(synk): pad/mask the last column tile so configurations where
            # (C//num_channels)*H*W has no VMEM-fitting 128-multiple divisor keep
            # the pipelined fast path (not hit by StyleGAN-ADA configurations).
            raise NotImplementedError(
                "(C // num_channels) * H * W must have a 128-multiple divisor "
                "that fits in VMEM")
    NT = chw_f // T

    x2 = x.reshape(N, CHW)         # free reshape; keep native dtype in HBM

    kernel = functools.partial(
        _mbstd_fused_kernel, G=G, M=M, HW=HW, CHW=CHW, T=T, NT=NT, chw_f=chw_f,
        hint_x=(chw_f % LANES == 0 and T % LANES == 0),
        hint_y=(CHW % LANES == 0 and HW % LANES == 0))

    # Actual VMEM footprint (all buffers are explicit above) + a little slack.
    tile_vmem = 4 * N * T * itemsize + (N + 3 * M) * T * 4
    vmem_limit = int(tile_vmem + N * HW * itemsize + M * LANES * 4 + (2 << 20))
    vmem_limit = max(vmem_limit, 16 << 20)   # stays well under v7x's 64 MiB
    # TODO(synk): stream the (N, H*W) stats-channel slab in 128-lane chunks if a
    # very large H*W ever pushes this footprint toward ~48 MiB on v7x.

    out2 = pl.pallas_call(
        kernel,
        out_shape=jax.ShapeDtypeStruct((N, OUT_W), x.dtype),
        grid_spec=pltpu.PrefetchScalarGridSpec(
            num_scalar_prefetch=0,
            grid=(F, NT),
            in_specs=[pl.BlockSpec((N, T), lambda f, t: (0, f * NT + t))],
            out_specs=pl.BlockSpec(memory_space=pl.ANY),
            scratch_shapes=[
                pltpu.VMEM((2, N, T), x.dtype),        # x -> out staging (2 slots)
                pltpu.VMEM((M, LANES), jnp.float32),   # lane-wise std accumulator
                pltpu.VMEM((N, HW), x.dtype),          # stats-channel staging
                pltpu.SemaphoreType.DMA((3,)),
            ],
        ),
        compiler_params=pltpu.CompilerParams(
            dimension_semantics=("parallel", "arbitrary"),
            vmem_limit_bytes=vmem_limit,
        ),
    )(x2)

    return out2.reshape(N, C + F, H, W)


if __name__ == "__main__":
    key = jax.random.PRNGKey(0)
    N, C, H, W = 2, 4, 16, 16
    group_size = 2
    num_channels = 1

    x = jax.random.normal(key, (N, C, H, W), dtype=jnp.float32)

    out = minibatch_std_layer(x, group_size, num_channels)
    out = jax.block_until_ready(out)

    assert out.shape == (N, C + num_channels, H, W), out.shape

    # Reference in plain JAX (same math as the PyTorch module).
    G = min(group_size, N)
    F = num_channels
    cpf = C // F
    y = x.reshape(G, -1, F, cpf, H, W)
    y = y - y.mean(axis=0)
    y = (y ** 2).mean(axis=0)
    y = jnp.sqrt(y + 1e-8)
    y = y.mean(axis=(2, 3, 4))
    y = y.reshape(-1, F, 1, 1)
    y = jnp.tile(y, (G, 1, H, W))
    ref = jnp.concatenate([x, y], axis=1)

    assert jnp.allclose(out, ref, atol=1e-5, rtol=1e-5)
    print("KERNEL_OK")
</pallas_src>

<mosaic_0001>
module attributes {stable_mosaic.version = 11 : i64} {
  func.func @_mbstd_fused_kernel(%arg0: i32, %arg1: i32, %arg2: memref<2x512xf32, #tpu.memory_space<vmem>>, %arg3: memref<2x1280xf32, #tpu.memory_space<any>>, %arg4: memref<2x2x512xf32, #tpu.memory_space<vmem>>, %arg5: memref<1x128xf32, #tpu.memory_space<vmem>>, %arg6: memref<2x256xf32, #tpu.memory_space<vmem>>, %arg7: memref<3x!tpu.dma_semaphore, #tpu.memory_space<semaphore_mem>>) attributes {dimension_semantics = [#tpu.dimension_semantics<parallel>, #tpu.dimension_semantics<arbitrary>], iteration_bounds = array<i64: 1, 2>, scalar_prefetch = 0 : i64, scratch_operands = 4 : i64, tpu.core_type = #tpu.core_type<tc>, window_params = [{transform_indices = @transform_0, window_bounds = array<i64: 2, 512>}, {}]} {
    %c2_i32 = arith.constant 2 : i32
    %c0_i32 = arith.constant 0 : i32
    %0 = arith.cmpi eq, %c2_i32, %c0_i32 : i32
    %c1_i32 = arith.constant 1 : i32
    %1 = arith.select %0, %c1_i32, %c2_i32 : i32
    %2 = arith.remsi %arg1, %1 : i32
    %c0_i32_0 = arith.constant 0 : i32
    %3 = arith.cmpi ne, %2, %c0_i32_0 : i32
    %c0_i32_1 = arith.constant 0 : i32
    %4 = arith.cmpi slt, %2, %c0_i32_1 : i32
    %c0_i32_2 = arith.constant 0 : i32
    %5 = arith.cmpi slt, %1, %c0_i32_2 : i32
    %6 = arith.xori %4, %5 : i1
    %7 = arith.andi %6, %3 : i1
    %8 = arith.addi %2, %1 : i32
    %9 = arith.select %7, %8, %2 : i32
    %c0 = arith.constant 0 : index
    %c0_3 = arith.constant 0 : index
    %10 = vector.load %arg2[%c0, %c0_3] : memref<2x512xf32, #tpu.memory_space<vmem>>, vector<2x512xf32>
    %c0_i32_4 = arith.constant 0 : i32
    %11 = arith.cmpi eq, %9, %c0_i32_4 : i32
    %12 = arith.extui %11 : i1 to i32
    %c0_i32_5 = arith.constant 0 : i32
    %13 = arith.cmpi ne, %12, %c0_i32_5 : i32
    scf.if %13 {
      %c0_21 = arith.constant 0 : index
      %c0_22 = arith.constant 0 : index
      %c0_23 = arith.constant 0 : index
      %59 = vector.load %arg4[%c0_21, %c0_22, %c0_23] : memref<2x2x512xf32, #tpu.memory_space<vmem>>, vector<1x2x512xf32>
      %60 = vector.shape_cast %59 : vector<1x2x512xf32> to vector<2x512xf32>
      %61 = vector.shape_cast %10 : vector<2x512xf32> to vector<1x2x512xf32>
      tpu.vector_store %arg4[%c0_21, %c0_22, %c0_23], %61 {strides = array<i32>} : memref<2x2x512xf32, #tpu.memory_space<vmem>>, vector<1x2x512xf32>,
    } else {
    }
    %c1_i32_6 = arith.constant 1 : i32
    %14 = arith.cmpi eq, %9, %c1_i32_6 : i32
    %15 = arith.extui %14 : i1 to i32
    %c0_i32_7 = arith.constant 0 : i32
    %16 = arith.cmpi ne, %15, %c0_i32_7 : i32
    scf.if %16 {
      %c1 = arith.constant 1 : index
      %c0_21 = arith.constant 0 : index
      %c0_22 = arith.constant 0 : index
      %59 = vector.load %arg4[%c1, %c0_21, %c0_22] : memref<2x2x512xf32, #tpu.memory_space<vmem>>, vector<1x2x512xf32>
      %60 = vector.shape_cast %59 : vector<1x2x512xf32> to vector<2x512xf32>
      %61 = vector.shape_cast %10 : vector<2x512xf32> to vector<1x2x512xf32>
      tpu.vector_store %arg4[%c1, %c0_21, %c0_22], %61 {strides = array<i32>} : memref<2x2x512xf32, #tpu.memory_space<vmem>>, vector<1x2x512xf32>,
    } else {
    }
    %c1024_i32 = arith.constant 1024 : i32
    %17 = arith.muli %arg0, %c1024_i32 : i32
    %c512_i32 = arith.constant 512 : i32
    %18 = arith.muli %arg1, %c512_i32 : i32
    %19 = arith.addi %17, %18 : i32
    %20 = tpu.assume_multiple %19, 128 : i32
    %c0_i32_8 = arith.constant 0 : i32
    %c0_i32_9 = arith.constant 0 : i32
    %21 = tpu.memref_slice %arg4[%9, %c0_i32_8, %c0_i32_9] : memref<2x2x512xf32, #tpu.memory_space<vmem>> -> memref<1x2x512xf32, #tpu.memory_space<vmem>>
    %22 = tpu.memref_squeeze %21 : memref<1x2x512xf32, #tpu.memory_space<vmem>> -> memref<2x512xf32, #tpu.memory_space<vmem>>
    %c0_i32_10 = arith.constant 0 : i32
    %23 = tpu.memref_slice %arg3[%c0_i32_10, %20] : memref<2x1280xf32, #tpu.memory_space<any>> -> memref<2x512xf32, #tpu.memory_space<any>>
    %24 = tpu.memref_slice %arg7[%9] : memref<3x!tpu.dma_semaphore, #tpu.memory_space<semaphore_mem>> -> memref<1x!tpu.dma_semaphore, #tpu.memory_space<semaphore_mem>>
    %25 = tpu.memref_squeeze %24 : memref<1x!tpu.dma_semaphore, #tpu.memory_space<semaphore_mem>> -> memref<!tpu.dma_semaphore, #tpu.memory_space<semaphore_mem>>
    tpu.enqueue_dma source(%22 : memref<2x512xf32, #tpu.memory_space<vmem>>) target(%23 : memref<2x512xf32, #tpu.memory_space<any>>) target_semaphore(%25 : memref<!tpu.dma_semaphore, #tpu.memory_space<semaphore_mem>>)
    %c0_i32_11 = arith.constant 0 : i32
    %26 = arith.cmpi eq, %arg1, %c0_i32_11 : i32
    %27 = arith.extui %26 : i1 to i32
    %c0_i32_12 = arith.constant 0 : i32
    %28 = arith.cmpi ne, %27, %c0_i32_12 : i32
    scf.if %28 {
      %cst_21 = arith.constant 0.000000e+00 : f32
      %59 = vector.broadcast %cst_21 : f32 to vector<1x128xf32>
      %c0_22 = arith.constant 0 : index
      %c0_23 = arith.constant 0 : index
      %60 = vector.load %arg5[%c0_22, %c0_23] : memref<1x128xf32, #tpu.memory_space<vmem>>, vector<1x128xf32>
      tpu.vector_store %arg5[%c0_22, %c0_23], %59 {strides = array<i32>} : memref<1x128xf32, #tpu.memory_space<vmem>>, vector<1x128xf32>,
    } else {
    }
    %29 = vector.extract_strided_slice %10 {offsets = [0, 0], sizes = [1, 512], strides = [1, 1]} : vector<2x512xf32> to vector<1x512xf32>
    %30 = vector.extract_strided_slice %10 {offsets = [1, 0], sizes = [1, 512], strides = [1, 1]} : vector<2x512xf32> to vector<1x512xf32>
    %31 = arith.addf %29, %30 : vector<1x512xf32>
    %cst = arith.constant 5.000000e-01 : f32
    %32 = vector.broadcast %cst : f32 to vector<1x512xf32>
    %33 = arith.mulf %31, %32 : vector<1x512xf32>
    %34 = vector.extract_strided_slice %10 {offsets = [0, 0], sizes = [1, 512], strides = [1, 1]} : vector<2x512xf32> to vector<1x512xf32>
    %35 = arith.subf %34, %33 : vector<1x512xf32>
    %36 = arith.mulf %35, %35 : vector<1x512xf32>
    %37 = vector.extract_strided_slice %10 {offsets = [1, 0], sizes = [1, 512], strides = [1, 1]} : vector<2x512xf32> to vector<1x512xf32>
    %38 = arith.subf %37, %33 : vector<1x512xf32>
    %39 = arith.mulf %38, %38 : vector<1x512xf32>
    %40 = arith.addf %36, %39 : vector<1x512xf32>
    %cst_13 = arith.constant 5.000000e-01 : f32
    %41 = vector.broadcast %cst_13 : f32 to vector<1x512xf32>
    %42 = arith.mulf %40, %41 : vector<1x512xf32>
    %cst_14 = arith.constant 9.99999993E-9 : f32
    %43 = vector.broadcast %cst_14 : f32 to vector<1x512xf32>
    %44 = arith.addf %42, %43 : vector<1x512xf32>
    %45 = math.sqrt %44 : vector<1x512xf32>
    %46 = vector.extract_strided_slice %45 {offsets = [0, 0], sizes = [1, 128], strides = [1, 1]} : vector<1x512xf32> to vector<1x128xf32>
    %47 = vector.extract_strided_slice %45 {offsets = [0, 128], sizes = [1, 128], strides = [1, 1]} : vector<1x512xf32> to vector<1x128xf32>
    %48 = arith.addf %46, %47 : vector<1x128xf32>
    %49 = vector.extract_strided_slice %45 {offsets = [0, 256], sizes = [1, 128], strides = [1, 1]} : vector<1x512xf32> to vector<1x128xf32>
    %50 = arith.addf %48, %49 : vector<1x128xf32>
    %51 = vector.extract_strided_slice %45 {offsets = [0, 384], sizes = [1, 128], strides = [1, 1]} : vector<1x512xf32> to vector<1x128xf32>
    %52 = arith.addf %50, %51 : vector<1x128xf32>
    %c0_15 = arith.constant 0 : index
    %c0_16 = arith.constant 0 : index
    %53 = vector.load %arg5[%c0_15, %c0_16] : memref<1x128xf32, #tpu.memory_space<vmem>>, vector<1x128xf32>
    %54 = arith.addf %53, %52 : vector<1x128xf32>
    %c0_17 = arith.constant 0 : index
    %c0_18 = arith.constant 0 : index
    %55 = vector.load %arg5[%c0_17, %c0_18] : memref<1x128xf32, #tpu.memory_space<vmem>>, vector<1x128xf32>
    tpu.vector_store %arg5[%c0_17, %c0_18], %54 {strides = array<i32>} : memref<1x128xf32, #tpu.memory_space<vmem>>, vector<1x128xf32>,
    %c1_i32_19 = arith.constant 1 : i32
    %56 = arith.cmpi eq, %arg1, %c1_i32_19 : i32
    %57 = arith.extui %56 : i1 to i32
    %c0_i32_20 = arith.constant 0 : i32
    %58 = arith.cmpi ne, %57, %c0_i32_20 : i32
    scf.if %58 {
      %c0_21 = arith.constant 0 : index
      %c0_22 = arith.constant 0 : index
      %59 = vector.load %arg5[%c0_21, %c0_22] : memref<1x128xf32, #tpu.memory_space<vmem>>, vector<1x128xf32>
      %cst_23 = arith.constant dense<0.000000e+00> : vector<1xf32>
      %60 = vector.multi_reduction <add>, %59, %cst_23 [1] : vector<1x128xf32> to vector<1xf32>
      %61 = vector.shape_cast %60 : vector<1xf32> to vector<1x1xf32>
      %cst_24 = arith.constant 9.765625E-4 : f32
      %62 = vector.broadcast %cst_24 : f32 to vector<1x1xf32>
      %63 = arith.mulf %61, %62 : vector<1x1xf32>
      %64 = tpu.concatenate %63, %63 in 0 : vector<1x1xf32>, vector<1x1xf32> -> vector<2x1xf32>
      %65 = vector.shape_cast %64 : vector<2x1xf32> to vector<2x1xf32>
      %66 = vector.broadcast %65 : vector<2x1xf32> to vector<2x256xf32>
      %c0_25 = arith.constant 0 : index
      %c0_26 = arith.constant 0 : index
      %67 = vector.load %arg6[%c0_25, %c0_26] : memref<2x256xf32, #tpu.memory_space<vmem>>, vector<2x256xf32>
      tpu.vector_store %arg6[%c0_25, %c0_26], %66 {strides = array<i32>} : memref<2x256xf32, #tpu.memory_space<vmem>>, vector<2x256xf32>,
      %c256_i32 = arith.constant 256 : i32
      %68 = arith.muli %arg0, %c256_i32 : i32
      %c1024_i32_27 = arith.constant 1024 : i32
      %69 = arith.addi %c1024_i32_27, %68 : i32
      %70 = tpu.assume_multiple %69, 128 : i32
      %c2_i32_28 = arith.constant 2 : i32
      %c0_i32_29 = arith.constant 0 : i32
      %71 = tpu.memref_slice %arg3[%c0_i32_29, %70] : memref<2x1280xf32, #tpu.memory_space<any>> -> memref<2x256xf32, #tpu.memory_space<any>>
      %72 = tpu.memref_slice %arg7[%c2_i32_28] : memref<3x!tpu.dma_semaphore, #tpu.memory_space<semaphore_mem>> -> memref<1x!tpu.dma_semaphore, #tpu.memory_space<semaphore_mem>>
      %73 = tpu.memref_squeeze %72 : memref<1x!tpu.dma_semaphore, #tpu.memory_space<semaphore_mem>> -> memref<!tpu.dma_semaphore, #tpu.memory_space<semaphore_mem>>
      tpu.enqueue_dma source(%arg6 : memref<2x256xf32, #tpu.memory_space<vmem>>) target(%71 : memref<2x256xf32, #tpu.memory_space<any>>) target_semaphore(%73 : memref<!tpu.dma_semaphore, #tpu.memory_space<semaphore_mem>>)
      %c0_i32_30 = arith.constant 0 : i32
      %c0_i32_31 = arith.constant 0 : i32
      %74 = tpu.memref_slice %arg4[%9, %c0_i32_30, %c0_i32_31] : memref<2x2x512xf32, #tpu.memory_space<vmem>> -> memref<1x2x512xf32, #tpu.memory_space<vmem>>
      %75 = tpu.memref_squeeze %74 : memref<1x2x512xf32, #tpu.memory_space<vmem>> -> memref<2x512xf32, #tpu.memory_space<vmem>>
      %c0_i32_32 = arith.constant 0 : i32
      %76 = tpu.memref_slice %arg3[%c0_i32_32, %20] : memref<2x1280xf32, #tpu.memory_space<any>> -> memref<2x512xf32, #tpu.memory_space<any>>
      %77 = tpu.memref_slice %arg7[%9] : memref<3x!tpu.dma_semaphore, #tpu.memory_space<semaphore_mem>> -> memref<1x!tpu.dma_semaphore, #tpu.memory_space<semaphore_mem>>
      %78 = tpu.memref_squeeze %77 : memref<1x!tpu.dma_semaphore, #tpu.memory_space<semaphore_mem>> -> memref<!tpu.dma_semaphore, #tpu.memory_space<semaphore_mem>>
      tpu.wait_dma2 semaphore(%78 : memref<!tpu.dma_semaphore, #tpu.memory_space<semaphore_mem>>) src(%75 : memref<2x512xf32, #tpu.memory_space<vmem>>) dst(%76 : memref<2x512xf32, #tpu.memory_space<any>>)
      %c1_i32_33 = arith.constant 1 : i32
      %79 = arith.subi %c1_i32_33, %9 : i32
      %c1_i32_34 = arith.constant 1 : i32
      %80 = arith.subi %c1_i32_34, %9 : i32
      %c0_i32_35 = arith.constant 0 : i32
      %c0_i32_36 = arith.constant 0 : i32
      %81 = tpu.memref_slice %arg4[%79, %c0_i32_35, %c0_i32_36] : memref<2x2x512xf32, #tpu.memory_space<vmem>> -> memref<1x2x512xf32, #tpu.memory_space<vmem>>
      %82 = tpu.memref_squeeze %81 : memref<1x2x512xf32, #tpu.memory_space<vmem>> -> memref<2x512xf32, #tpu.memory_space<vmem>>
      %c0_i32_37 = arith.constant 0 : i32
      %c0_i32_38 = arith.constant 0 : i32
      %83 = tpu.memref_slice %arg3[%c0_i32_37, %c0_i32_38] : memref<2x1280xf32, #tpu.memory_space<any>> -> memref<2x512xf32, #tpu.memory_space<any>>
      %84 = tpu.memref_slice %arg7[%80] : memref<3x!tpu.dma_semaphore, #tpu.memory_space<semaphore_mem>> -> memref<1x!tpu.dma_semaphore, #tpu.memory_space<semaphore_mem>>
      %85 = tpu.memref_squeeze %84 : memref<1x!tpu.dma_semaphore, #tpu.memory_space<semaphore_mem>> -> memref<!tpu.dma_semaphore, #tpu.memory_space<semaphore_mem>>
      tpu.wait_dma2 semaphore(%85 : memref<!tpu.dma_semaphore, #tpu.memory_space<semaphore_mem>>) src(%82 : memref<2x512xf32, #tpu.memory_space<vmem>>) dst(%83 : memref<2x512xf32, #tpu.memory_space<any>>)
      %c2_i32_39 = arith.constant 2 : i32
      %c0_i32_40 = arith.constant 0 : i32
      %86 = tpu.memref_slice %arg3[%c0_i32_40, %70] : memref<2x1280xf32, #tpu.memory_space<any>> -> memref<2x256xf32, #tpu.memory_space<any>>
      %87 = tpu.memref_slice %arg7[%c2_i32_39] : memref<3x!tpu.dma_semaphore, #tpu.memory_space<semaphore_mem>> -> memref<1x!tpu.dma_semaphore, #tpu.memory_space<semaphore_mem>>
      %88 = tpu.memref_squeeze %87 : memref<1x!tpu.dma_semaphore, #tpu.memory_space<semaphore_mem>> -> memref<!tpu.dma_semaphore, #tpu.memory_space<semaphore_mem>>
      tpu.wait_dma2 semaphore(%88 : memref<!tpu.dma_semaphore, #tpu.memory_space<semaphore_mem>>) src(%arg6 : memref<2x256xf32, #tpu.memory_space<vmem>>) dst(%86 : memref<2x256xf32, #tpu.memory_space<any>>)
    } else {
    }
    return
  }
  func.func @transform_0(%arg0: i32, %arg1: i32) -> (i32, i32) {
    %c2_i32 = arith.constant 2 : i32
    %0 = arith.muli %arg0, %c2_i32 : i32
    %1 = arith.addi %0, %arg1 : i32
    %c0_i32 = arith.constant 0 : i32
    %c0_i32_0 = arith.constant 0 : i32
    return %c0_i32, %1 : i32, i32
  }
}

</mosaic_0001>

<llo_original>
// kernel: tpu_custom_call.1
$region0: #{tpu_custom_call.1}
  #allocation0 [shape = 'u32[]', space=smem, size = 0x4, offset = 0x4, fixed_abs, tag = 'smem constant byte address 0x4 - core index']
  #allocation1 [shape = 'u32[144,128]{1,0:T(1,128)}', space=vmem, size = 0x12000, scoped, tag = 'internal scratch']
  #allocation2 [shape = 'f32[2,2,512]{2,1,0:T(2,128)}', space=vmem, size = 0x2000, scoped, tag = 'scratch operand']
  #allocation3 [shape = 'f32[1,128]{1,0:T(1,128)}', space=vmem, size = 0x200, scoped, tag = 'scratch operand']
  #allocation4 [shape = 'f32[2,256]{1,0:T(2,128)}', space=vmem, size = 0x800, scoped, tag = 'scratch operand']
  #allocation5 [shape = 's32[3]{0}', space=sflag, size = 0xc, scoped, tag = 'scratch operand']
  #allocation8 [shape = 's32[]', space=sflag, size = 0x4, offset = 0, fixed_abs, tag = 'sflag constant byte address 0x0 - dummy sync flag']
  #allocation9 [shape = 's32[]', space=sflag, size = 0x4, offset = 0, fixed_abs, tag = 'sflag constant byte address 0x0 - dummy sync flag']
  #allocation10 [shape = 'u32[]', space=smem, size = 0x4, offset = 0x44, fixed_abs, tag = 'smem constant byte address 0x44 - assertion arg 0']
  #allocation11 [shape = 'u32[]', space=smem, size = 0x4, offset = 0x48, fixed_abs, tag = 'smem constant byte address 0x48 - assertion arg 1']
  #allocation12 [shape = 's32[]', space=sflag, size = 0x4, offset = 0, fixed_abs, tag = 'sflag constant byte address 0x0 - dummy sync flag']
  #allocation13 [shape = 's32[]', space=sflag, size = 0x4, offset = 0, fixed_abs, tag = 'sflag constant byte address 0x0 - dummy sync flag']
  %s0 = inlined_call_operand.hbm [shape: f32[2,1024], index: 0, kind: input, shape index: {}]
  %s1 = inlined_call_operand.hbm [shape: f32[2,1280], index: 1, kind: output, shape index: {}]
  %s2 = sld [smem:[#allocation0]]
  $region53: #{tpu_custom_call.1} parent=0
    _
  %s4 = ssub.s32 1, %s2
  %s5 = scalar_select 0, %s4, %s2
  $region1: #{tpu_custom_call.1} parent=0
    #allocation6 [shape = 'u8[8192]{0}', space=vmem, size = 0x2000, scoped, tag = 'input window, operand 0']
    #allocation7 [shape = 's32[2]{0}', space=sflag, size = 0x8, scoped, tag = 'scoped memory for tpu_custom_call.1']
    %6 = vsyncpa [#allocation7], 0
    %s7 = scalar_lea.sflag [#allocation7], 1
    %8 = vsyncpa %s7, 0
    loop: start=0, step=1, limit=3
    $region2: #{tpu_custom_call.1} parent=1 // loop_pre_header
      _
    $region3: #{tpu_custom_call.1} parent=1 // loop_header
      %s10 = sphi 0, %s14
      %p11 = scmp.ge.s32.totalorder %s10, 3
      %s16 = sphi 0, %s26
      %s17 = sphi 0, %s22
      %s18 = sphi 0, %s16
      %s19 = sphi 0, %s17
      %s33 = sphi 0, %s35
      %s36 = sphi 0, %s33
      %s46 = sphi 0, %s36
    $region4: #{tpu_custom_call.1} parent=1 // loop_header_branch
      %13 = sbr.rel (%p11) target = $region8
    $region5: #{tpu_custom_call.1} parent=1 // loop_body
      %s15 = ssub.s32 %s10, 1
      %s20 = sadd.s32 1, %s17
      %p21 = scmp.ge.s32.totalorder %s20, 2
      %s22 = scalar_select %p21, 0, %s20
      %s23 = sadd.s32 1, %s16
      %s24 = scalar_select %p21, %s23, %s16
      %p25 = scmp.ge.s32.totalorder %s24, 1
      %s26 = scalar_select %p25, 0, %s24
      %s27 = smul.u32 %s16, 2
      %s28 = sadd.s32 %s27, %s17
      %s29 = smul.u32 %s26, 2
      %s30 = sadd.s32 %s29, %s22
      %s31 = ssub.s32 %s28, %s30
      %p32 = scmp.eq.s32.totalorder %s31, 0
      %s34 = sadd.s32 %s33, 1
      %s35 = scalar_select %p32, %s33, %s34
      %p37 = pneg %p32
      %p38 = scmp.eq.s32.totalorder %s10, 1
      %p39 = por %p37, %p38
      %p40 = scmp.ne.s32.totalorder %s33, %s36
      %p41 = scmp.eq.s32.totalorder %s10, 0
      %p42 = por %p40, %p41
      %p43 = scmp.ne.s32.totalorder %s33, %s36
      %p44 = scmp.eq.s32.totalorder %s15, 1
      %p45 = por %p43, %p44
      %p47 = scmp.ne.s32.totalorder %s36, %s46
      %p48 = scmp.eq.s32.totalorder %s15, 0
      %p49 = por %p47, %p48
      %p50 = scmp.le.s32.totalorder 1, %s10
      // Predicated region
      $region9: #{tpu_custom_call.1} parent=5 // pred_check
        %p51 = pneg %p50
      $region10: #{tpu_custom_call.1} parent=5 // pred_check_branch
        %53 = sbr.rel (%p51) target = $region12
      $region11: #{tpu_custom_call.1} parent=5 // pred_region
        %s54 = ssub.s32 %s10, 1
      $region12: #{tpu_custom_call.1} parent=5 // pred_fallthru
        _
      %p55 = scmp.lt.s32.totalorder %s10, 2
      // Predicated region
      $region13: #{tpu_custom_call.1} parent=5 // pred_check
        %p56 = pneg %p55
      $region14: #{tpu_custom_call.1} parent=5 // pred_check_branch
        %58 = sbr.rel (%p56) target = $region16
      $region15: #{tpu_custom_call.1} parent=5 // pred_region
        // Predicated region
        $region17: #{tpu_custom_call.1} parent=15 // pred_check
          %p59 = pneg %p42
        $region18: #{tpu_custom_call.1} parent=15 // pred_check_branch
          %61 = sbr.rel (%p59) target = $region20
        $region19: #{tpu_custom_call.1} parent=15 // pred_region
          %s62 = sand.u32 %s33, 1
          %s63 = scalar_lea.sflag [#allocation7], %s62
          %s64 = sand.u32 %s33, 1
          %s65 = smul.addr %s64, 8
          %s66 = scalar_lea.vmem [#allocation6], %s65
          %s67 = smul.u32 %s16, 2
          %s68 = sadd.s32 %s67, %s17
          %s69 = smul.u32 4, %s68
          %s71 = ssub.s32 128, 128
          %72 = vsyncadd %s63, %s71
          %s73 = smul.addr %s69, 32
          %s74 = scalar_lea.hbm %s0, %s73
          %s76 = sshll.u32 %s66, 4
          %s77 = int_to_ptr.vmem [resolvable:$true] %s76
          %79 = dma.hbm_to_vmem [thread:$0]  %s74, 128, %s77, %s63
        $region20: #{tpu_custom_call.1} parent=15 // pred_fallthru
          _
      $region16: #{tpu_custom_call.1} parent=5 // pred_fallthru
        _
      %p80 = scmp.le.s32.totalorder 1, %s10
      // Predicated region
      $region21: #{tpu_custom_call.1} parent=5 // pred_check
        %p81 = pneg %p80
      $region22: #{tpu_custom_call.1} parent=5 // pred_check_branch
        %83 = sbr.rel (%p81) target = $region24
      $region23: #{tpu_custom_call.1} parent=5 // pred_region
        %s84 = ssub.s32 %s10, 1
        %s85 = sand.u32 %s36, 1
        %s86 = scalar_lea.sflag [#allocation7], %s85
        %s87 = sand.u32 %s36, 1
        %s88 = smul.addr %s87, 8
        %s89 = scalar_lea.vmem [#allocation6], %s88
        // Predicated region
        $region25: #{tpu_custom_call.1} parent=23 // pred_check
          %p90 = pneg %p49
        $region26: #{tpu_custom_call.1} parent=23 // pred_check_branch
          %92 = sbr.rel (%p90) target = $region28
        $region27: #{tpu_custom_call.1} parent=23 // pred_region
          %93 = dma.done %s86, 128
        $region28: #{tpu_custom_call.1} parent=23 // pred_fallthru
          _
        %s94 = sand.u32 %s36, 1
        %s95 = scalar_lea.sflag [#allocation7], %s94
        %s96 = sand.u32 %s36, 1
        %s97 = smul.addr %s96, 8
        %s98 = scalar_lea.vmem [#allocation6], %s97
        %p99 = pneg %p49
        %p100 = pneg %p45
        %s101 = smul.u32 %s18, 2
        %s102 = sadd.s32 %s101, %s19
        %s103 = smul.u32 4, %s102
        %p104 = scmp.lt.s32.totalorder %s19, 0
        %s105 = ssub.s32 0, %s19
        %s106 = scalar_select %p104, %s105, %s19
        %s107 = sand.u32 %s106, 1
        %s108 = ssub.s32 0, %s107
        %s109 = scalar_select %p104, %s108, %s107
        %p110 = scmp.ne.s32.totalorder %s109, 0
        %p111 = scmp.lt.s32.totalorder %s109, 0
        %p112 = pnand %p111, %p110
        %p113 = pneg %p112
        %s114 = sadd.s32 %s109, 2
        %s115 = scalar_select %p113, %s114, %s109
        %v116 = vld [vmem:[%s89] sm:$0xff]
        %p117 = scmp.eq.s32.totalorder %s115, 0
        // Predicated region
        $region29: #{tpu_custom_call.1} parent=23 // pred_check
          %p118 = pneg %p117
        $region30: #{tpu_custom_call.1} parent=23 // pred_check_branch
          %120 = sbr.rel (%p118) target = $region32
        $region31: #{tpu_custom_call.1} parent=23 // pred_region
          %121 = vst [vmem:[#allocation2] sm:$0xff] %v116
        $region32: #{tpu_custom_call.1} parent=23 // pred_fallthru
          _
        %p122 = scmp.eq.s32.totalorder %s115, 1
        // Predicated region
        $region33: #{tpu_custom_call.1} parent=23 // pred_check
          %p123 = pneg %p122
        $region34: #{tpu_custom_call.1} parent=23 // pred_check_branch
          %125 = sbr.rel (%p123) target = $region36
        $region35: #{tpu_custom_call.1} parent=23 // pred_region
          %s126 = scalar_lea.vmem [#allocation2], 8
          %127 = vst [vmem:[%s126] sm:$0xff] %v116
        $region36: #{tpu_custom_call.1} parent=23 // pred_fallthru
          _
        %s128 = smul.u32 %s18, 1024
        %s129 = smul.u32 %s19, 512
        %s130 = sadd.s32 %s128, %s129
        %s131 = smul.u32 %s115, 4
        %s132 = smul.addr %s131, 2
        %s133 = scalar_lea.vmem [#allocation2], %s132
        %s134 = sshra.s32 %s130, 7
        %s135 = sand.u32 %s130, 127
        %s136 = smul.addr %s134, 32
        %s137 = scalar_lea.hbm %s1, %s136
        %s138 = scalar_lea.sflag [#allocation5], %s115
        // Predicated region
        $region37: #{tpu_custom_call.1} parent=23 // pred_check
          _
        $region38: #{tpu_custom_call.1} parent=23 // pred_check_branch
          %140 = sbr.rel target = $region40
        $region39: #{tpu_custom_call.1} parent=23 // pred_region
          %141 = sst [smem:[#allocation10]] [#allocation9]
          %142 = sst [smem:[#allocation11]] [#allocation8]
        $region40: #{tpu_custom_call.1} parent=23 // pred_fallthru
          _
        %144 = shalt.err (0)
        %s146 = sshll.u32 %s133, 4
        %s147 = int_to_ptr.vmem [resolvable:$true] %s146
        %149 = dma.vmem_to_hbm [thread:$0]  %s147, 128, %s137, %s138
        %p150 = scmp.eq.s32.totalorder %s19, 0
        // Predicated region
        $region41: #{tpu_custom_call.1} parent=23 // pred_check
          %p151 = pneg %p150
        $region42: #{tpu_custom_call.1} parent=23 // pred_check_branch
          %153 = sbr.rel (%p151) target = $region44
        $region43: #{tpu_custom_call.1} parent=23 // pred_region
          %154 = vst [vmem:[#allocation3] sm:$0x1] 0.0
        $region44: #{tpu_custom_call.1} parent=23 // pred_fallthru
          _
        %v156 = vrot.slane %v116, 7
        %v157 = vrot.slane %v156, 2
        %v159 = vadd.f32 %v116, %v157
        %v160 = vmul.f32 %v159, 0.5
        %v161 = vsub.f32 %v116, %v160
        %v162 = vmul.f32 %v161, %v161
        %v164 = vrot.slane %v160, 7
        %v166 = vsub.f32 %v116, %v164
        %v167 = vmul.f32 %v166, %v166
        %v169 = vrot.slane %v167, 7
        %v170 = vrot.slane %v169, 2
        %v172 = vadd.f32 %v162, %v170
        %v173 = vmul.f32 %v172, 0.5
        %v174 = vadd.f32 %v173, 1e-08
        %v175 = vrsqrt.pop %v174
        %v176 = vmul.f32 %v174, %v175
        %vm177 = vcmp.eq.f32.partialorder %v174, inf
        %v178 = vsel %vm177, %v174, %v176
        %vm179 = vcmp.eq.f32.partialorder %v174, 0.0
        %v180 = vand.u32 %v174, 2147483648
        %v181 = vsel %vm179, %v180, %v178
        %v183 = vrot.slane %v181, 2
        %v185 = vadd.f32 %v181, %v183
        %v186 = vrot.slane %v181, 4
        %v188 = vadd.f32 %v185, %v186
        %v189 = vrot.slane %v181, 6
        %v191 = vadd.f32 %v188, %v189
        %v192 = vld [vmem:[#allocation3] sm:$0x1]
        %v193 = vadd.f32 %v192, %v191
        %194 = vst [vmem:[#allocation3] sm:$0x1] %v193
        %p195 = scmp.eq.s32.totalorder %s19, 1
        // Predicated region
        $region45: #{tpu_custom_call.1} parent=23 // pred_check
          %p196 = pneg %p195
        $region46: #{tpu_custom_call.1} parent=23 // pred_check_branch
          %198 = sbr.rel (%p196) target = $region48
        $region47: #{tpu_custom_call.1} parent=23 // pred_region
          %v199 = vld [vmem:[#allocation3] sm:$0x1]
          %vm200 = vcmask 1040384
          %v201 = vsel %vm200, %v199, 0.0
          %202 = vadd.xlane.f32.xlu0 %v201
          %v203 = vpop.xlane.xlu0 %202
          %v204 = vmul.f32 %v203, 0.0009765625
          %v206 = vrot.slane %v204, 7
          %v208 = vsel %vm200, %v204, %v206
          %210 = vset.pattern.permute.xlu0 0
          %211 = vperm.xlu0 %210, %v208
          %v212 = vpop.permute.xlu0 %211
          %v214 = vunpack.c.l.s4 269488144
          %v215 = vunpack.c.0.s8 %v214
          %v216 = vlaneseq
          %v217 = vshrl.u32 %v216, 7
          %v218 = vsub.s32 %v215, %v217
          %v219 = vrot.slane %v212, %v218
          %221 = vst [vmem:[#allocation4] sm:$0xf] %v219
          %s222 = smul.u32 %s18, 256
          %s223 = sadd.s32 %s222, 1024
          %s224 = sshra.s32 %s223, 7
          %s225 = sand.u32 %s223, 127
          %s226 = smul.addr %s224, 32
          %s227 = scalar_lea.hbm %s1, %s226
          %s228 = scalar_lea.sflag [#allocation5], 2
          // Predicated region
          $region49: #{tpu_custom_call.1} parent=47 // pred_check
            _
          $region50: #{tpu_custom_call.1} parent=47 // pred_check_branch
            %230 = sbr.rel target = $region52
          $region51: #{tpu_custom_call.1} parent=47 // pred_region
            %231 = sst [smem:[#allocation10]] [#allocation13]
            %232 = sst [smem:[#allocation11]] [#allocation12]
          $region52: #{tpu_custom_call.1} parent=47 // pred_fallthru
            _
          %234 = shalt.err (0)
          %s236 = sshll.u32 [#allocation4], 4
          %s237 = int_to_ptr.vmem [resolvable:$true] %s236
          %239 = dma.vmem_to_hbm [thread:$0]  %s237, 64, %s227, %s228
          %s240 = smul.u32 2, 1
          %s241 = smul.u32 %s240, 4
          %s242 = sshll.u32 %s241, 4
          %243 = dma.done %s138, %s242
          %s244 = ssub.s32 1, %s115
          %s245 = scalar_lea.sflag [#allocation5], %s244
          %s246 = sshll.u32 %s241, 4
          %247 = dma.done %s245, %s246
          %s248 = smul.u32 %s240, 2
          %s249 = sshll.u32 %s248, 4
          %250 = dma.done %s228, %s249
        $region48: #{tpu_custom_call.1} parent=23 // pred_fallthru
          _
      $region24: #{tpu_custom_call.1} parent=5 // pred_fallthru
        _
    $region6: #{tpu_custom_call.1} parent=1 // loop_footer
      %s14 = sadd.s32 1, %s10
    $region7: #{tpu_custom_call.1} parent=1 // loop_footer_branch
      %9 = sbr.rel target = $region3
    $region8: #{tpu_custom_call.1} parent=1 // loop_exit
      _
    %251 = vsyncpa [#allocation7], 1
    %s252 = scalar_lea.sflag [#allocation7], 1
    %253 = vsyncpa %s252, 1
  %254 = vsyncmov [#allocation5]
  %s255 = vpop.sfrf %254
  %p256 = scmp.eq.s32.totalorder %s255, 0
  %p257 = pneg %p256
  %259 = shalt.err (%p257)
  %s260 = scalar_lea.sflag [#allocation5], 1
  %261 = vsyncmov %s260
  %s262 = vpop.sfrf %261
  %p263 = scmp.eq.s32.totalorder %s262, 0
  %p264 = pneg %p263
  %266 = shalt.err (%p264)
  %s267 = scalar_lea.sflag [#allocation5], 2
  %268 = vsyncmov %s267
  %s269 = vpop.sfrf %268
  %p270 = scmp.eq.s32.totalorder %s269, 0
  %p271 = pneg %p270
  %273 = shalt.err (%p271)

</llo_original>
